<compile_context>
chip_gen: v5e
topology: v5e:2x2
jax: 0.10.0
libtpu: 0.0.40
codegen_flags: <defaults>
</compile_context>

<pallas_src>
import math
import jax
import jax.numpy as jnp
from jax.experimental import pallas as pl
from jax.experimental.pallas import tpu as pltpu


# ----------------------------------------------------------------------------
# Small tiling helpers
# ----------------------------------------------------------------------------
def _round_up(x, m):
    return ((x + m - 1) // m) * m


def _choose_tile(dim, preferred, granule):
    """Pick a block size for `dim`:
       - full dim if it is small (a full-extent block is always legal),
       - else the largest multiple of `granule` <= `preferred` that divides `dim`,
       - else `preferred` rounded down to `granule` (caller pads)."""
    if dim <= preferred:
        return dim
    best = (preferred // granule) * granule
    t = best
    while t >= granule:
        if dim % t == 0:
            return t
        t -= granule
    return best


def _pad_axis(a, axis, new_size):
    pad = new_size - a.shape[axis]
    if pad == 0:
        return a
    widths = [(0, 0)] * a.ndim
    widths[axis] = (0, pad)
    return jnp.pad(a, widths)


# ----------------------------------------------------------------------------
# Kernel 1: fused, tiled linear projection  y = x2d @ W   (no bias: qkv_bias=False)
# ----------------------------------------------------------------------------
def _matmul_kernel(x_ref, w_ref, o_ref, acc_ref):
    @pl.when(pl.program_id(2) == 0)
    def _init():
        acc_ref[...] = jnp.zeros_like(acc_ref)

    acc_ref[...] += jnp.dot(
        x_ref[...], w_ref[...], preferred_element_type=jnp.float32
    )

    @pl.when(pl.program_id(2) == pl.num_programs(2) - 1)
    def _finalize():
        o_ref[...] = acc_ref[...].astype(o_ref.dtype)


def linear_pallas(x2d, w, *, tm=256, tn=512, tk=512):
    """x2d: (M, D), w: (D, F) -> (M, F). Tiled + pipelined matmul with f32 accumulation."""
    M, D = x2d.shape
    Dw, F = w.shape
    assert D == Dw
    bm = _choose_tile(M, tm, 8)
    bk = _choose_tile(D, tk, 128)
    bn = _choose_tile(F, tn, 128)
    Mp, Dp, Fp = _round_up(M, bm), _round_up(D, bk), _round_up(F, bn)

    xp = _pad_axis(_pad_axis(x2d, 0, Mp), 1, Dp)   # zero-pad: contributes 0 to the dot
    wp = _pad_axis(_pad_axis(w, 0, Dp), 1, Fp)

    out = pl.pallas_call(
        _matmul_kernel,
        out_shape=jax.ShapeDtypeStruct((Mp, Fp), x2d.dtype),
        grid=(Mp // bm, Fp // bn, Dp // bk),
        in_specs=[
            pl.BlockSpec((bm, bk), lambda i, j, k: (i, k)),
            pl.BlockSpec((bk, bn), lambda i, j, k: (k, j)),
        ],
        out_specs=pl.BlockSpec((bm, bn), lambda i, j, k: (i, j)),
        scratch_shapes=[pltpu.VMEM((bm, bn), jnp.float32)],
        compiler_params=pltpu.CompilerParams(
            dimension_semantics=("parallel", "parallel", "arbitrary"),
            vmem_limit_bytes=32 * 1024 * 1024,
        ),
    )(xp, wp)

    if (Mp, Fp) != (M, F):
        out = out[:M, :F]
    return out


# ----------------------------------------------------------------------------
# Kernel 2: flash-style attention, all heads per grid step, grid (B, R, Nq, Nk)
# ----------------------------------------------------------------------------
def _make_attn_kernel(num_heads, scale, n_valid, tile, masked, approx_recip):
    def kernel(q_ref, k_ref, v_ref, o_ref, m_sc, l_sc, acc_sc):
        ki = pl.program_id(3)

        @pl.when(ki == 0)
        def _init():
            m_sc[...] = jnp.full(m_sc.shape, -jnp.inf, m_sc.dtype)
            l_sc[...] = jnp.zeros_like(l_sc)
            acc_sc[...] = jnp.zeros_like(acc_sc)

        if masked:
            col = jax.lax.broadcasted_iota(jnp.int32, (tile, tile), 1) + ki * tile
            valid = col < n_valid

        # Static unroll over heads: per-head work is plain 2-D MXU dots
        # (contraction over head_dim without materializing a transposed K tile).
        for h in range(num_heads):
            q = q_ref[0, :, 0, h, :] * scale          # (tq, Hd) -- scale folded into q
            k = k_ref[0, :, 0, h, :]                  # (tk, Hd)
            v = v_ref[0, :, 0, h, :]                  # (tk, Hd)

            s = jax.lax.dot_general(
                q, k, (((1,), (1,)), ((), ())),
                preferred_element_type=jnp.float32,
            )                                         # (tq, tk)
            if masked:
                s = jnp.where(valid, s, -1e30)

            m_prev = m_sc[h]                          # (tq, 1)
            m_new = jnp.maximum(m_prev, jnp.max(s, axis=-1, keepdims=True))
            alpha = jnp.exp(m_prev - m_new)
            p = jnp.exp(s - m_new)

            l_sc[h] = alpha * l_sc[h] + jnp.sum(p, axis=-1, keepdims=True)
            acc_sc[h] = alpha * acc_sc[h] + jax.lax.dot_general(
                p.astype(v.dtype), v, (((1,), (0,)), ((), ())),
                preferred_element_type=jnp.float32,
            )
            m_sc[h] = m_new

        @pl.when(ki == pl.num_programs(3) - 1)
        def _finalize():
            inv = pl.reciprocal(l_sc[...], approx=approx_recip)   # (H, tq, 1)
            o_ref[0, 0] = (acc_sc[...] * inv).astype(o_ref.dtype)

    return kernel


def attention_pallas(y5, num_heads, head_dim, rank, scale, *,
                     tile_n=256, approx_recip=False):
    """y5: (B, N, 2R+1, H, Hd) fused projection output.
       slot r -> q_r, slot R+r -> k_r, slot 2R -> shared V (never broadcast over rank).
       Returns (B, R, H, N, Hd)."""
    B, N, G, H, Hd = y5.shape
    assert G == 2 * rank + 1 and H == num_heads and Hd == head_dim

    t = _choose_tile(N, tile_n, 8)
    Np = _round_up(N, t)
    masked = Np != N
    if masked:
        y5 = jnp.pad(y5, ((0, 0), (0, Np - N), (0, 0), (0, 0), (0, 0)))

    qkv_block = (1, t, 1, H, Hd)
    kernel = _make_attn_kernel(H, scale, N, t, masked, approx_recip)

    out = pl.pallas_call(
        kernel,
        out_shape=jax.ShapeDtypeStruct((B, rank, H, Np, Hd), y5.dtype),
        grid=(B, rank, Np // t, Np // t),
        in_specs=[
            # q_r : slot r
            pl.BlockSpec(qkv_block, lambda b, r, qi, ki: (b, qi, r, 0, 0)),
            # k_r : slot R + r
            pl.BlockSpec(qkv_block, lambda b, r, qi, ki: (b, ki, rank + r, 0, 0)),
            # v   : slot 2R, index_map ignores r (no broadcast materialization)
            pl.BlockSpec(qkv_block, lambda b, r, qi, ki: (b, ki, 2 * rank, 0, 0)),
        ],
        out_specs=pl.BlockSpec(
            (1, 1, H, t, Hd), lambda b, r, qi, ki: (b, r, 0, qi, 0)
        ),
        scratch_shapes=[
            pltpu.VMEM((H, t, 1), jnp.float32),   # running max
            pltpu.VMEM((H, t, 1), jnp.float32),   # running denom
            pltpu.VMEM((H, t, Hd), jnp.float32),  # running numerator
        ],
        compiler_params=pltpu.CompilerParams(
            dimension_semantics=("parallel", "parallel", "parallel", "arbitrary"),
            vmem_limit_bytes=32 * 1024 * 1024,
        ),
    )(y5, y5, y5)

    if masked:
        out = out[:, :, :, :N, :]
    return out


# ----------------------------------------------------------------------------
# AttentionBranch forward
# ----------------------------------------------------------------------------
def attention_branch_forward(x, w_qk, w_v, num_heads, head_dim, rank, *,
                             approx_recip=False):
    B, N, D = x.shape
    H, Hd, R = num_heads, head_dim, rank
    scale = head_dim ** (-0.5)

    # One-time weight re-layout + fusion (weights only, negligible vs activations):
    # PyTorch qk feature order is (2, H, R, Hd); re-order to (2, R, H, Hd) and append
    # w_v so the fused projection output reshapes directly (for free) to
    # (B, N, 2R+1, H, Hd) with slot r -> q_r, R+r -> k_r, 2R -> v.
    w_qk_perm = (
        w_qk.reshape(D, 2, H, R, Hd).transpose(0, 1, 3, 2, 4).reshape(D, 2 * R * H * Hd)
    )
    w_fused = jnp.concatenate([w_qk_perm, w_v], axis=1)   # (D, (2R+1)*H*Hd)

    x2d = x.reshape(B * N, D)
    y = linear_pallas(x2d, w_fused)                        # (B*N, (2R+1)*H*Hd)
    y5 = y.reshape(B, N, 2 * R + 1, H, Hd)                 # free reshape, no transpose

    return attention_pallas(y5, H, Hd, R, scale, approx_recip=approx_recip)


# ----------------------------------------------------------------------------
# Pure-JAX reference (matches the PyTorch module) for verification
# ----------------------------------------------------------------------------
def attention_branch_reference(x, w_qk, w_v, num_heads, head_dim, rank):
    B, N, D = x.shape
    H, Hd, R = num_heads, head_dim, rank
    scale = head_dim ** (-0.5)
    qk = (x.reshape(B * N, D) @ w_qk).reshape(B, N, 2, H, R, Hd)
    qk = qk.transpose(2, 0, 4, 3, 1, 5)
    q, k = qk[0], qk[1]
    v = (x.reshape(B * N, D) @ w_v).reshape(B, N, H, Hd).transpose(0, 2, 1, 3)
    v = jnp.broadcast_to(v[:, None], (B, R, H, N, Hd))
    attn = jnp.einsum("brhnd,brhmd->brhnm", q, k) * scale
    attn = jax.nn.softmax(attn, axis=-1)
    return jnp.einsum("brhnm,brhmd->brhnd", attn, v)


if __name__ == "__main__":
    # Small shapes consistent with the module.
    B, N, D = 2, 8, 32
    num_heads, head_dim, rank = 4, 8, 2
    assert D % num_heads == 0

    key = jax.random.PRNGKey(0)
    kx, kqk, kv = jax.random.split(key, 3)

    x = jax.random.normal(kx, (B, N, D), dtype=jnp.float32)

    # Deterministic nn.Linear-style init (uniform(-1/sqrt(D), 1/sqrt(D))), bias=False.
    bound = 1.0 / math.sqrt(D)
    w_qk = jax.random.uniform(
        kqk, (D, num_heads * head_dim * rank * 2), jnp.float32, -bound, bound
    )
    w_v = jax.random.uniform(
        kv, (D, num_heads * head_dim), jnp.float32, -bound, bound
    )

    # approx_recip=False keeps the softmax normalization exact for the tolerance check;
    # production can flip it to True to move the divide onto the (otherwise idle) EUP.
    out = attention_branch_forward(
        x, w_qk, w_v, num_heads, head_dim, rank, approx_recip=False
    )
    out = jax.block_until_ready(out)

    ref = attention_branch_reference(x, w_qk, w_v, num_heads, head_dim, rank)
    assert out.shape == (B, rank, num_heads, N, head_dim), out.shape
    assert jnp.allclose(out, ref, atol=1e-5, rtol=1e-5), (
        float(jnp.max(jnp.abs(out - ref)))
    )

    print("KERNEL_OK")
</pallas_src>

<mosaic_0001>
module attributes {stable_mosaic.version = 11 : i64} {
  func.func @_matmul_kernel(%arg0: i32, %arg1: i32, %arg2: i32, %arg3: memref<16x32xf32, #tpu.memory_space<vmem>>, %arg4: memref<32x160xf32, #tpu.memory_space<vmem>>, %arg5: memref<16x160xf32, #tpu.memory_space<vmem>>, %arg6: memref<16x160xf32, #tpu.memory_space<vmem>>) attributes {dimension_semantics = [#tpu.dimension_semantics<parallel>, #tpu.dimension_semantics<parallel>, #tpu.dimension_semantics<arbitrary>], iteration_bounds = array<i64: 1, 1, 1>, scalar_prefetch = 0 : i64, scratch_operands = 1 : i64, tpu.core_type = #tpu.core_type<tc>, window_params = [{transform_indices = @transform_0, window_bounds = array<i64: 16, 32>}, {transform_indices = @transform_1, window_bounds = array<i64: 32, 160>}, {transform_indices = @transform_2, window_bounds = array<i64: 16, 160>}]} {
    %c0_i32 = arith.constant 0 : i32
    %0 = arith.cmpi eq, %arg2, %c0_i32 : i32
    %1 = arith.extui %0 : i1 to i32
    %c0_i32_0 = arith.constant 0 : i32
    %2 = arith.cmpi ne, %1, %c0_i32_0 : i32
    scf.if %2 {
      %cst_10 = arith.constant 0.000000e+00 : f32
      %12 = vector.broadcast %cst_10 : f32 to vector<16x160xf32>
      %c0_11 = arith.constant 0 : index
      %c0_12 = arith.constant 0 : index
      %13 = vector.load %arg6[%c0_11, %c0_12] : memref<16x160xf32, #tpu.memory_space<vmem>>, vector<16x160xf32>
      tpu.vector_store %arg6[%c0_11, %c0_12], %12 {strides = array<i32>} : memref<16x160xf32, #tpu.memory_space<vmem>>, vector<16x160xf32>,
    } else {
    }
    %c0 = arith.constant 0 : index
    %c0_1 = arith.constant 0 : index
    %3 = vector.load %arg6[%c0, %c0_1] : memref<16x160xf32, #tpu.memory_space<vmem>>, vector<16x160xf32>
    %c0_2 = arith.constant 0 : index
    %c0_3 = arith.constant 0 : index
    %4 = vector.load %arg3[%c0_2, %c0_3] : memref<16x32xf32, #tpu.memory_space<vmem>>, vector<16x32xf32>
    %c0_4 = arith.constant 0 : index
    %c0_5 = arith.constant 0 : index
    %5 = vector.load %arg4[%c0_4, %c0_5] : memref<32x160xf32, #tpu.memory_space<vmem>>, vector<32x160xf32>
    %cst = arith.constant dense<0.000000e+00> : vector<16x160xf32>
    %6 = tpu.matmul %4, %5, %cst {dimension_numbers = #tpu.dot_dimension_numbers<[1], [0], [0], [1], [0, 0, 1, 1], [], []>} : vector<16x32xf32>, vector<32x160xf32>, vector<16x160xf32> -> vector<16x160xf32>
    %7 = arith.addf %3, %6 : vector<16x160xf32>
    %c0_6 = arith.constant 0 : index
    %c0_7 = arith.constant 0 : index
    %8 = vector.load %arg6[%c0_6, %c0_7] : memref<16x160xf32, #tpu.memory_space<vmem>>, vector<16x160xf32>
    tpu.vector_store %arg6[%c0_6, %c0_7], %7 {strides = array<i32>} : memref<16x160xf32, #tpu.memory_space<vmem>>, vector<16x160xf32>,
    %c0_i32_8 = arith.constant 0 : i32
    %9 = arith.cmpi eq, %arg2, %c0_i32_8 : i32
    %10 = arith.extui %9 : i1 to i32
    %c0_i32_9 = arith.constant 0 : i32
    %11 = arith.cmpi ne, %10, %c0_i32_9 : i32
    scf.if %11 {
      %c0_10 = arith.constant 0 : index
      %c0_11 = arith.constant 0 : index
      %12 = vector.load %arg6[%c0_10, %c0_11] : memref<16x160xf32, #tpu.memory_space<vmem>>, vector<16x160xf32>
      %c0_12 = arith.constant 0 : index
      %c0_13 = arith.constant 0 : index
      %13 = vector.load %arg5[%c0_12, %c0_13] : memref<16x160xf32, #tpu.memory_space<vmem>>, vector<16x160xf32>
      tpu.vector_store %arg5[%c0_12, %c0_13], %12 {strides = array<i32>} : memref<16x160xf32, #tpu.memory_space<vmem>>, vector<16x160xf32>,
    } else {
    }
    return
  }
  func.func @transform_0(%arg0: i32, %arg1: i32, %arg2: i32) -> (i32, i32) {
    %c0_i32 = arith.constant 0 : i32
    return %arg0, %arg2 : i32, i32
  }
  func.func @transform_1(%arg0: i32, %arg1: i32, %arg2: i32) -> (i32, i32) {
    %c0_i32 = arith.constant 0 : i32
    return %arg2, %arg1 : i32, i32
  }
  func.func @transform_2(%arg0: i32, %arg1: i32, %arg2: i32) -> (i32, i32) {
    %c0_i32 = arith.constant 0 : i32
    return %arg0, %arg1 : i32, i32
  }
}

</mosaic_0001>

<llo_original>
// kernel: tpu_custom_call.1
$region0: #{tpu_custom_call.1}
  #allocation0 [shape = 'u32[]', space=smem, size = 0x4, offset = 0x4, fixed_abs, tag = 'smem constant byte address 0x4 - core index']
  #allocation1 [shape = 'u32[72,128]{1,0:T(1,128)}', space=vmem, size = 0x9000, scoped, tag = 'internal scratch']
  #allocation2 [shape = 'f32[16,160]{1,0:T(8,128)}', space=vmem, size = 0x4000, scoped, tag = 'scratch operand']
  %s0 = inlined_call_operand.hbm [shape: f32[16,32], index: 0, kind: input, shape index: {}]
  %s1 = inlined_call_operand.hbm [shape: f32[32,160], index: 1, kind: input, shape index: {}]
  %s2 = inlined_call_operand.hbm [shape: f32[16,160], index: 2, kind: output, shape index: {}]
  %s3 = sld [smem:[#allocation0]]
  $region34: #{tpu_custom_call.1} parent=0
    _
  %s5 = ssub.s32 1, %s3
  %s6 = scalar_select 0, %s5, %s3
  $region1: #{tpu_custom_call.1} parent=0
    #allocation3 [shape = 'u8[8192]{0}', space=vmem, size = 0x2000, scoped, tag = 'input window, operand 0, single buffered']
    #allocation4 [shape = 's32[1]{0}', space=sflag, size = 0x4, scoped, tag = 'scoped memory for tpu_custom_call.1']
    #allocation5 [shape = 's32[1]{0}', space=sflag, size = 0x4, scoped, tag = 'scoped memory for tpu_custom_call.1']
    #allocation6 [shape = 'u8[32768]{0}', space=vmem, size = 0x8000, scoped, tag = 'input window, operand 1, single buffered']
    #allocation7 [shape = 's32[1]{0}', space=sflag, size = 0x4, scoped, tag = 'scoped memory for tpu_custom_call.1']
    #allocation8 [shape = 'u8[16384]{0}', space=vmem, size = 0x4000, scoped, tag = 'output window, operand 0, single buffered']
    %7 = vsyncpa [#allocation4], 0
    %8 = vsyncpa [#allocation7], 0
    %9 = vsyncpa [#allocation5], 0
    // Predicated region
    $region2: #{tpu_custom_call.1} parent=1 // pred_check
      _
    $region3: #{tpu_custom_call.1} parent=1 // pred_check_branch
      %11 = sbr.rel (0) target = $region5
    $region4: #{tpu_custom_call.1} parent=1 // pred_region
      %13 = vsyncadd [#allocation4], 0
      %s14 = sshll.u32 %s0, 4
      %s15 = int_to_ptr.hbm [resolvable:$true] %s14
      %s16 = sshll.u32 [#allocation3], 4
      %s17 = int_to_ptr.vmem [resolvable:$true] %s16
      %22 = dma.hbm_to_vmem [thread:$0]  %s15, 256, %s17, [#allocation4], 128, 128, 8
    $region5: #{tpu_custom_call.1} parent=1 // pred_fallthru
      _
    // Predicated region
    $region6: #{tpu_custom_call.1} parent=1 // pred_check
      _
    $region7: #{tpu_custom_call.1} parent=1 // pred_check_branch
      %24 = sbr.rel (0) target = $region9
    $region8: #{tpu_custom_call.1} parent=1 // pred_region
      %26 = vsyncadd [#allocation7], 0
      %s27 = sshll.u32 %s1, 4
      %s28 = int_to_ptr.hbm [resolvable:$true] %s27
      %s29 = sshll.u32 [#allocation6], 4
      %s30 = int_to_ptr.vmem [resolvable:$true] %s29
      %35 = dma.hbm_to_vmem [thread:$0]  %s28, 1024, %s30, [#allocation7], 256, 256, 16
    $region9: #{tpu_custom_call.1} parent=1 // pred_fallthru
      _
    // Predicated region
    $region10: #{tpu_custom_call.1} parent=1 // pred_check
      _
    $region11: #{tpu_custom_call.1} parent=1 // pred_check_branch
      %37 = sbr.rel (0) target = $region13
    $region12: #{tpu_custom_call.1} parent=1 // pred_region
      %39 = dma.done [#allocation4], 256
    $region13: #{tpu_custom_call.1} parent=1 // pred_fallthru
      _
    // Predicated region
    $region14: #{tpu_custom_call.1} parent=1 // pred_check
      _
    $region15: #{tpu_custom_call.1} parent=1 // pred_check_branch
      %41 = sbr.rel (0) target = $region17
    $region16: #{tpu_custom_call.1} parent=1 // pred_region
      %43 = dma.done [#allocation7], 1024
    $region17: #{tpu_custom_call.1} parent=1 // pred_fallthru
      _
    %p44 = scmp.eq.s32.totalorder 0, 0
    // Predicated region
    $region18: #{tpu_custom_call.1} parent=1 // pred_check
      %p45 = pneg %p44
    $region19: #{tpu_custom_call.1} parent=1 // pred_check_branch
      %47 = sbr.rel (%p45) target = $region21
    $region20: #{tpu_custom_call.1} parent=1 // pred_region
      %48 = vst [vmem:[#allocation2] sm:$0xff] 0.0
      %vm49 = vcmask 261120
      %50 = vst.msk [vmem:[#allocation2 + $0x8] sm:$0xff] %vm49, 0.0
      %51 = vst [vmem:[#allocation2 + $0x10] sm:$0xff] 0.0
      %52 = vst.msk [vmem:[#allocation2 + $0x18] sm:$0xff] %vm49, 0.0
    $region21: #{tpu_custom_call.1} parent=1 // pred_fallthru
      _
    %v53 = vld [vmem:[#allocation2] sm:$0xff]
    %v54 = vld [vmem:[#allocation2 + $0x8] sm:$0xff]
    %v55 = vld [vmem:[#allocation2 + $0x10] sm:$0xff]
    %v56 = vld [vmem:[#allocation2 + $0x18] sm:$0xff]
    %v57 = vld [vmem:[#allocation3] sm:$0xff]
    %v58 = vld [vmem:[#allocation3 + $0x8] sm:$0xff]
    %v59 = vld [vmem:[#allocation6] sm:$0xff]
    %v60 = vld [vmem:[#allocation6 + $0x8] sm:$0xff]
    %v61 = vld [vmem:[#allocation6 + $0x10] sm:$0xff]
    %v62 = vld [vmem:[#allocation6 + $0x18] sm:$0xff]
    %v63 = vld [vmem:[#allocation6 + $0x20] sm:$0xff]
    %v64 = vld [vmem:[#allocation6 + $0x28] sm:$0xff]
    %v65 = vld [vmem:[#allocation6 + $0x30] sm:$0xff]
    %v66 = vld [vmem:[#allocation6 + $0x38] sm:$0xff]
    %vm67 = vcmask 261120
    %v69 = vsel %vm67, %v57, 0
    %v72 = vsel %vm67, %v58, 0
    %74 = vmatpush.msra.mxu0 0.0
    %75 = vmatpush.msra.mxu0 0.0
    %76 = vmatpush.msra.mxu0 0.0
    %77 = vmatpush.msra.mxu0 0.0
    %78 = vmatpush.msra.mxu0 0.0
    %79 = vmatpush.msra.mxu0 0.0
    %80 = vmatpush.msra.mxu0 0.0
    %81 = vmatpush.msra.mxu0 0.0
    %82 = vmatpush.msra.mxu0 0.0
    %83 = vmatpush.msra.mxu0 0.0
    %84 = vmatpush.msra.mxu0 0.0
    %85 = vmatpush.msra.mxu0 0.0
    %86 = vmatpush.msra.mxu0 %v65
    %87 = vmatpush.msra.mxu0 %v63
    %88 = vmatpush.msra.mxu0 %v61
    %89 = vmatpush.msra.mxu0 %v59
    %90 = vmatmul.f32.gmra.mxu0 %v69
    %v91 = vpop.f32.mrf.mxu0
    %v92 = vadd.f32 0.0, %v91
    %93 = vmatmul.f32.gmra.mxu0 %v72
    %v94 = vpop.f32.mrf.mxu0
    %v95 = vadd.f32 0.0, %v94
    %96 = vdwg.mxu0
    %97 = vmatpush.msra.mxu0 0.0
    %98 = vmatpush.msra.mxu0 0.0
    %99 = vmatpush.msra.mxu0 0.0
    %100 = vmatpush.msra.mxu0 0.0
    %101 = vmatpush.msra.mxu0 0.0
    %102 = vmatpush.msra.mxu0 0.0
    %103 = vmatpush.msra.mxu0 0.0
    %104 = vmatpush.msra.mxu0 0.0
    %105 = vmatpush.msra.mxu0 0.0
    %106 = vmatpush.msra.mxu0 0.0
    %107 = vmatpush.msra.mxu0 0.0
    %108 = vmatpush.msra.mxu0 0.0
    %109 = vmatpush.msra.mxu0 %v66
    %110 = vmatpush.msra.mxu0 %v64
    %111 = vmatpush.msra.mxu0 %v62
    %112 = vmatpush.msra.mxu0 %v60
    %113 = vmatmul.f32.gmra.mxu0 %v69
    %v114 = vpop.f32.mrf.mxu0
    %v115 = vadd.f32 0.0, %v114
    %116 = vmatmul.f32.gmra.mxu0 %v72
    %v117 = vpop.f32.mrf.mxu0
    %v118 = vadd.f32 0.0, %v117
    %119 = vdwg.mxu0
    %v120 = vadd.f32 %v53, %v92
    %v121 = vadd.f32 %v54, %v115
    %v122 = vadd.f32 %v55, %v95
    %v123 = vadd.f32 %v56, %v118
    %124 = vst [vmem:[#allocation2] sm:$0xff] %v120
    %125 = vst.msk [vmem:[#allocation2 + $0x8] sm:$0xff] %vm67, %v121
    %126 = vst [vmem:[#allocation2 + $0x10] sm:$0xff] %v122
    %127 = vst.msk [vmem:[#allocation2 + $0x18] sm:$0xff] %vm67, %v123
    // Predicated region
    $region22: #{tpu_custom_call.1} parent=1 // pred_check
      %p128 = pneg %p44
    $region23: #{tpu_custom_call.1} parent=1 // pred_check_branch
      %130 = sbr.rel (%p128) target = $region25
    $region24: #{tpu_custom_call.1} parent=1 // pred_region
      %v131 = vld [vmem:[#allocation2] sm:$0xff]
      %v132 = vld [vmem:[#allocation2 + $0x8] sm:$0xff]
      %v133 = vld [vmem:[#allocation2 + $0x10] sm:$0xff]
      %v134 = vld [vmem:[#allocation2 + $0x18] sm:$0xff]
      %135 = vst [vmem:[#allocation8] sm:$0xff] %v131
      %136 = vst.msk [vmem:[#allocation8 + $0x8] sm:$0xff] %vm67, %v132
      %137 = vst [vmem:[#allocation8 + $0x10] sm:$0xff] %v133
      %138 = vst.msk [vmem:[#allocation8 + $0x18] sm:$0xff] %vm67, %v134
    $region25: #{tpu_custom_call.1} parent=1 // pred_fallthru
      _
    // Predicated region
    $region26: #{tpu_custom_call.1} parent=1 // pred_check
      _
    $region27: #{tpu_custom_call.1} parent=1 // pred_check_branch
      %140 = sbr.rel (0) target = $region29
    $region28: #{tpu_custom_call.1} parent=1 // pred_region
      %142 = vsyncadd [#allocation5], 0
      %s143 = sshll.u32 [#allocation8], 4
      %s144 = int_to_ptr.vmem [resolvable:$true] %s143
      %s145 = sshll.u32 %s2, 4
      %s146 = int_to_ptr.hbm [resolvable:$true] %s145
      %151 = dma.vmem_to_hbm [thread:$0]  %s144, 512, %s146, [#allocation5], 256, 256, 16
    $region29: #{tpu_custom_call.1} parent=1 // pred_fallthru
      _
    // Predicated region
    $region30: #{tpu_custom_call.1} parent=1 // pred_check
      _
    $region31: #{tpu_custom_call.1} parent=1 // pred_check_branch
      %153 = sbr.rel (0) target = $region33
    $region32: #{tpu_custom_call.1} parent=1 // pred_region
      %155 = dma.done [#allocation5], 512
    $region33: #{tpu_custom_call.1} parent=1 // pred_fallthru
      _
    %156 = vsyncpa [#allocation4], 1
    %157 = vsyncpa [#allocation7], 1
    %158 = vsyncpa [#allocation5], 1

</llo_original>
